<compile_context>
chip_gen: v7x
topology: tpu7x:2x2x1
jax: 0.10.0
libtpu: 0.0.40
codegen_flags: <defaults>
</compile_context>

<pallas_src>
import jax
import jax.numpy as jnp
from jax.experimental import pallas as pl
from jax.experimental.pallas import tpu as pltpu


def _round_up(x, m):
    return ((x + m - 1) // m) * m


def _bf16_epilogue_default():
    """Use a bf16 VALU epilogue on v6e / v7x; fp32 elsewhere (v5e has no bf16 VPU)."""
    try:
        kind = jax.devices()[0].device_kind.lower()
    except Exception:
        return False
    return ("v6" in kind) or ("v7" in kind) or ("tpu7" in kind)


def _make_mlp_kernel(bf16_epilogue):
    def mlp_kernel(x_ref,
                   w1_ref, b1_ref,
                   w2_ref, b2_ref,
                   w3_ref, b3_ref,
                   w4_ref, b4_ref,
                   o_ref):
        def act(h_f32, b_ref):
            if bf16_epilogue:
                # v6e/v7x: packed bf16 add + max (half the VALU ops / vreg pressure).
                h = h_f32.astype(jnp.bfloat16) + b_ref[...]
                return jnp.maximum(h, 0)
            # v5e & default: fp32 epilogue, cast once for the next MXU matmul.
            return jnp.maximum(h_f32 + b_ref[...], 0).astype(jnp.bfloat16)

        # In-kernel f32 -> bf16 cast: hides under the MXU, halves HBM traffic on x
        # compared with a wrapper-side cast pass.
        x = x_ref[...].astype(jnp.bfloat16)
        # fc1 + relu
        h = act(jnp.dot(x, w1_ref[...], preferred_element_type=jnp.float32), b1_ref)
        # fc2 + relu
        h = act(jnp.dot(h, w2_ref[...], preferred_element_type=jnp.float32), b2_ref)
        # fc3 + relu (output columns zero-padded 32 -> 128; stays lane-dense)
        h = act(jnp.dot(h, w3_ref[...], preferred_element_type=jnp.float32), b3_ref)
        # fc4: (1,128) @ (tm,128)^T -> (1, tm); lane-dense output row.
        h4 = jax.lax.dot_general(
            w4_ref[...], h, (((1,), (1,)), ((), ())),
            preferred_element_type=jnp.float32)
        o_ref[0] = (h4 + b4_ref[0, 0]).astype(o_ref.dtype)

    return mlp_kernel


def jet_classifier_forward(x, params, *, tm=2048, bf16_epilogue=None):
    """x: (B, input_dim) float32.  params: dict (see init_params).  Returns (B, 1) f32."""
    B, D = x.shape
    if bf16_epilogue is None:
        bf16_epilogue = _bf16_epilogue_default()
    bias_dtype = jnp.bfloat16 if bf16_epilogue else jnp.float32

    # ---- batch tile selection -------------------------------------------------
    b8 = _round_up(B, 8)
    # Keep the double-buffered f32 x tile under ~8 MiB even for wide inputs.
    tm_cap = max(256, ((8 << 20) // (D * 4)) // 8 * 8)
    # tm_eff is either a multiple of 8 (< B) or exactly B, so the (8,128)
    # BlockSpec constraint is always satisfied without padding x.
    tm_eff = max(1, min(_round_up(tm, 8), tm_cap, B))
    num_tiles = pl.cdiv(B, tm_eff)
    # v7x: ensure >=2 tiles when the batch is big enough so the 'parallel' grid
    # axis actually shards across both TensorCores (harmless extra step elsewhere).
    if num_tiles == 1 and b8 >= 1024:
        tm_eff = _round_up(b8 // 2, 8)
        num_tiles = pl.cdiv(B, tm_eff)

    # ---- parameters: bf16 MXU operands; lane-dense padding of fc3/fc4 ---------
    w1 = params["w1"].astype(jnp.bfloat16)                                 # (D, 512)
    w2 = params["w2"].astype(jnp.bfloat16)                                 # (512, 128)
    w3 = jnp.pad(params["w3"], ((0, 0), (0, 96))).astype(jnp.bfloat16)     # (128, 128)
    w4 = jnp.pad(params["w4"].T, ((0, 0), (0, 96))).astype(jnp.bfloat16)   # (1, 128)
    b1 = params["b1"].astype(bias_dtype)                                   # (1, 512)
    b2 = params["b2"].astype(bias_dtype)                                   # (1, 128)
    b3 = jnp.pad(params["b3"], ((0, 0), (0, 96))).astype(bias_dtype)       # (1, 128)
    b4 = params["b4"].reshape(1, 1).astype(jnp.float32)                    # (1, 1) SMEM

    # ---- VMEM budget / cost estimate ------------------------------------------
    vmem_need = (
        2 * tm_eff * D * 4            # double-buffered f32 x tiles
        + tm_eff * 512 * (4 + 2)      # fc1 f32 result + bf16 copy
        + 2 * tm_eff * 128 * (4 + 2)  # fc2/fc3 results + bf16 copies
        + (2 << 20)                   # weights, biases, output blocks, slack
    )
    vmem_limit = int(min(max(2 * vmem_need, 32 << 20), 56 << 20))

    weight_elems = D * 512 + 512 * 128 + 128 * 128 + 128
    cost = pl.CostEstimate(
        flops=2 * B * weight_elems,
        transcendentals=0,
        bytes_accessed=B * D * 4 + B * 4 + 2 * weight_elems,
    )

    def full(arr):
        nd = arr.ndim
        return pl.BlockSpec(arr.shape, lambda i, _nd=nd: (0,) * _nd)

    out = pl.pallas_call(
        _make_mlp_kernel(bf16_epilogue),
        out_shape=jax.ShapeDtypeStruct((num_tiles, 1, tm_eff), jnp.float32),
        grid_spec=pltpu.PrefetchScalarGridSpec(
            num_scalar_prefetch=0,
            grid=(num_tiles,),
            in_specs=[
                pl.BlockSpec((tm_eff, D), lambda i: (i, 0)),        # x tile (ragged tail OK)
                full(w1), full(b1),
                full(w2), full(b2),
                full(w3), full(b3),
                full(w4),
                pl.BlockSpec(memory_space=pltpu.MemorySpace.SMEM),  # b4 scalar
            ],
            out_specs=pl.BlockSpec((1, 1, tm_eff), lambda i: (i, 0, 0)),
        ),
        compiler_params=pltpu.CompilerParams(
            dimension_semantics=("parallel",),
            vmem_limit_bytes=vmem_limit),
        cost_estimate=cost,
    )(x, w1, b1, w2, b2, w3, b3, w4, b4)

    # (num_tiles, 1, tm) lane-dense blocks -> (B, 1); tail garbage rows dropped.
    return out.reshape(num_tiles * tm_eff, 1)[:B]


def init_params(key, input_dim):
    """PyTorch nn.Linear-style init (uniform +-1/sqrt(fan_in)); weights stored (in, out)."""
    dims = [(input_dim, 512), (512, 128), (128, 32), (32, 1)]
    params = {}
    for idx, (fan_in, fan_out) in enumerate(dims, start=1):
        key, kw, kb = jax.random.split(key, 3)
        bound = 1.0 / jnp.sqrt(fan_in)
        params[f"w{idx}"] = jax.random.uniform(
            kw, (fan_in, fan_out), jnp.float32, minval=-bound, maxval=bound)
        params[f"b{idx}"] = jax.random.uniform(
            kb, (1, fan_out), jnp.float32, minval=-bound, maxval=bound)
    return params


def reference_forward(x, params, *, bf16_epilogue=False):
    """Pure-JAX reference mirroring the kernel numerics (bf16 matmuls, fp32 accum)."""
    def mm(a, w):
        return jnp.dot(a.astype(jnp.bfloat16), w.astype(jnp.bfloat16),
                       preferred_element_type=jnp.float32)

    def act(h, b):
        if bf16_epilogue:
            return jnp.maximum(h.astype(jnp.bfloat16) + b.astype(jnp.bfloat16), 0)
        return jnp.maximum(h + b, 0)

    h = act(mm(x, params["w1"]), params["b1"])
    h = act(mm(h, params["w2"]), params["b2"])
    h = act(mm(h, params["w3"]), params["b3"])
    return mm(h, params["w4"]) + params["b4"]


if __name__ == "__main__":
    key = jax.random.PRNGKey(0)
    input_dim = 32
    k_p, k_x1, k_x2, k_x3 = jax.random.split(key, 4)
    params = init_params(k_p, input_dim)
    bf16_epi = _bf16_epilogue_default()

    # Small single-tile batch.
    x1 = jax.random.normal(k_x1, (16, input_dim), jnp.float32)
    out1 = jax.block_until_ready(
        jet_classifier_forward(x1, params, bf16_epilogue=bf16_epi))
    ref1 = reference_forward(x1, params, bf16_epilogue=bf16_epi)
    assert out1.shape == (16, 1)
    assert jnp.allclose(out1, ref1, atol=5e-3, rtol=5e-3), "mismatch (small batch)"

    # Non-multiple batch + multi-tile grid: ragged last tile, no wrapper-side padding.
    x2 = jax.random.normal(k_x2, (300, input_dim), jnp.float32)
    out2 = jax.block_until_ready(
        jet_classifier_forward(x2, params, tm=128, bf16_epilogue=bf16_epi))
    ref2 = reference_forward(x2, params, bf16_epilogue=bf16_epi)
    assert out2.shape == (300, 1)
    assert jnp.allclose(out2, ref2, atol=5e-3, rtol=5e-3), "mismatch (multi-tile)"

    # Larger batch: exercises the >=2-tile split (dual-TensorCore path on v7x).
    x3 = jax.random.normal(k_x3, (1500, input_dim), jnp.float32)
    out3 = jax.block_until_ready(
        jet_classifier_forward(x3, params, bf16_epilogue=bf16_epi))
    ref3 = reference_forward(x3, params, bf16_epilogue=bf16_epi)
    assert out3.shape == (1500, 1)
    assert jnp.allclose(out3, ref3, atol=5e-3, rtol=5e-3), "mismatch (large batch)"

    print("KERNEL_OK")
</pallas_src>

<mosaic_0001>
module attributes {stable_mosaic.version = 11 : i64} {
  func.func @mlp_kernel(%arg0: i32, %arg1: memref<16x32xf32, #tpu.memory_space<vmem>>, %arg2: memref<32x512xbf16, #tpu.memory_space<vmem>>, %arg3: memref<1x512xf32, #tpu.memory_space<vmem>>, %arg4: memref<512x128xbf16, #tpu.memory_space<vmem>>, %arg5: memref<1x128xf32, #tpu.memory_space<vmem>>, %arg6: memref<128x128xbf16, #tpu.memory_space<vmem>>, %arg7: memref<1x128xf32, #tpu.memory_space<vmem>>, %arg8: memref<1x128xbf16, #tpu.memory_space<vmem>>, %arg9: memref<1x1xf32, #tpu.memory_space<smem>>, %arg10: memref<1x1x16xf32, #tpu.memory_space<vmem>>) attributes {dimension_semantics = [#tpu.dimension_semantics<parallel>], iteration_bounds = array<i64: 1>, scalar_prefetch = 0 : i64, scratch_operands = 0 : i64, tpu.core_type = #tpu.core_type<tc>, window_params = [{transform_indices = @transform_0, window_bounds = array<i64: 16, 32>}, {pipeline_mode = #tpu.pipeline_mode<synchronous>, transform_indices = @transform_1, window_bounds = array<i64: 32, 512>}, {pipeline_mode = #tpu.pipeline_mode<synchronous>, transform_indices = @transform_2, window_bounds = array<i64: 1, 512>}, {pipeline_mode = #tpu.pipeline_mode<synchronous>, transform_indices = @transform_3, window_bounds = array<i64: 512, 128>}, {pipeline_mode = #tpu.pipeline_mode<synchronous>, transform_indices = @transform_4, window_bounds = array<i64: 1, 128>}, {pipeline_mode = #tpu.pipeline_mode<synchronous>, transform_indices = @transform_5, window_bounds = array<i64: 128, 128>}, {pipeline_mode = #tpu.pipeline_mode<synchronous>, transform_indices = @transform_6, window_bounds = array<i64: 1, 128>}, {pipeline_mode = #tpu.pipeline_mode<synchronous>, transform_indices = @transform_7, window_bounds = array<i64: 1, 128>}, {transform_indices = @transform_8, window_bounds = array<i64: 1, 1>}, {transform_indices = @transform_9, window_bounds = array<i64: 1, 1, 16>}]} {
    %c0 = arith.constant 0 : index
    %c0_0 = arith.constant 0 : index
    %0 = vector.load %arg1[%c0, %c0_0] : memref<16x32xf32, #tpu.memory_space<vmem>>, vector<16x32xf32>
    %1 = arith.truncf %0 : vector<16x32xf32> to vector<16x32xbf16>
    %c0_1 = arith.constant 0 : index
    %c0_2 = arith.constant 0 : index
    %2 = vector.load %arg2[%c0_1, %c0_2] : memref<32x512xbf16, #tpu.memory_space<vmem>>, vector<32x512xbf16>
    %cst = arith.constant dense<0.000000e+00> : vector<16x512xf32>
    %3 = tpu.matmul %1, %2, %cst {dimension_numbers = #tpu.dot_dimension_numbers<[1], [0], [0], [1], [0, 0, 1, 1], [], []>} : vector<16x32xbf16>, vector<32x512xbf16>, vector<16x512xf32> -> vector<16x512xf32>
    %c0_3 = arith.constant 0 : index
    %c0_4 = arith.constant 0 : index
    %4 = vector.load %arg3[%c0_3, %c0_4] : memref<1x512xf32, #tpu.memory_space<vmem>>, vector<1x512xf32>
    %5 = vector.broadcast %4 : vector<1x512xf32> to vector<16x512xf32>
    %6 = arith.addf %3, %5 : vector<16x512xf32>
    %cst_5 = arith.constant 0.000000e+00 : f32
    %7 = vector.broadcast %cst_5 : f32 to vector<16x512xf32>
    %8 = arith.maximumf %6, %7 : vector<16x512xf32>
    %9 = arith.truncf %8 : vector<16x512xf32> to vector<16x512xbf16>
    %c0_6 = arith.constant 0 : index
    %c0_7 = arith.constant 0 : index
    %10 = vector.load %arg4[%c0_6, %c0_7] : memref<512x128xbf16, #tpu.memory_space<vmem>>, vector<512x128xbf16>
    %cst_8 = arith.constant dense<0.000000e+00> : vector<16x128xf32>
    %11 = tpu.matmul %9, %10, %cst_8 {dimension_numbers = #tpu.dot_dimension_numbers<[1], [0], [0], [1], [0, 0, 1, 1], [], []>} : vector<16x512xbf16>, vector<512x128xbf16>, vector<16x128xf32> -> vector<16x128xf32>
    %c0_9 = arith.constant 0 : index
    %c0_10 = arith.constant 0 : index
    %12 = vector.load %arg5[%c0_9, %c0_10] : memref<1x128xf32, #tpu.memory_space<vmem>>, vector<1x128xf32>
    %13 = vector.broadcast %12 : vector<1x128xf32> to vector<16x128xf32>
    %14 = arith.addf %11, %13 : vector<16x128xf32>
    %cst_11 = arith.constant 0.000000e+00 : f32
    %15 = vector.broadcast %cst_11 : f32 to vector<16x128xf32>
    %16 = arith.maximumf %14, %15 : vector<16x128xf32>
    %17 = arith.truncf %16 : vector<16x128xf32> to vector<16x128xbf16>
    %c0_12 = arith.constant 0 : index
    %c0_13 = arith.constant 0 : index
    %18 = vector.load %arg6[%c0_12, %c0_13] : memref<128x128xbf16, #tpu.memory_space<vmem>>, vector<128x128xbf16>
    %cst_14 = arith.constant dense<0.000000e+00> : vector<16x128xf32>
    %19 = tpu.matmul %17, %18, %cst_14 {dimension_numbers = #tpu.dot_dimension_numbers<[1], [0], [0], [1], [0, 0, 1, 1], [], []>} : vector<16x128xbf16>, vector<128x128xbf16>, vector<16x128xf32> -> vector<16x128xf32>
    %c0_15 = arith.constant 0 : index
    %c0_16 = arith.constant 0 : index
    %20 = vector.load %arg7[%c0_15, %c0_16] : memref<1x128xf32, #tpu.memory_space<vmem>>, vector<1x128xf32>
    %21 = vector.broadcast %20 : vector<1x128xf32> to vector<16x128xf32>
    %22 = arith.addf %19, %21 : vector<16x128xf32>
    %cst_17 = arith.constant 0.000000e+00 : f32
    %23 = vector.broadcast %cst_17 : f32 to vector<16x128xf32>
    %24 = arith.maximumf %22, %23 : vector<16x128xf32>
    %25 = arith.truncf %24 : vector<16x128xf32> to vector<16x128xbf16>
    %c0_18 = arith.constant 0 : index
    %c0_19 = arith.constant 0 : index
    %26 = vector.load %arg8[%c0_18, %c0_19] : memref<1x128xbf16, #tpu.memory_space<vmem>>, vector<1x128xbf16>
    %cst_20 = arith.constant dense<0.000000e+00> : vector<1x16xf32>
    %27 = tpu.matmul %26, %25, %cst_20 {dimension_numbers = #tpu.dot_dimension_numbers<[1], [1], [0], [0], [0, 0, 1, 0], [], []>} : vector<1x128xbf16>, vector<16x128xbf16>, vector<1x16xf32> -> vector<1x16xf32>
    %c0_21 = arith.constant 0 : index
    %c0_22 = arith.constant 0 : index
    %28 = memref.load %arg9[%c0_21, %c0_22] : memref<1x1xf32, #tpu.memory_space<smem>>
    %29 = vector.broadcast %28 : f32 to vector<1x16xf32>
    %30 = arith.addf %27, %29 : vector<1x16xf32>
    %c0_23 = arith.constant 0 : index
    %c0_24 = arith.constant 0 : index
    %c0_25 = arith.constant 0 : index
    %31 = vector.load %arg10[%c0_23, %c0_24, %c0_25] : memref<1x1x16xf32, #tpu.memory_space<vmem>>, vector<1x1x16xf32>
    %32 = vector.shape_cast %31 : vector<1x1x16xf32> to vector<1x16xf32>
    %33 = vector.shape_cast %30 : vector<1x16xf32> to vector<1x1x16xf32>
    tpu.vector_store %arg10[%c0_23, %c0_24, %c0_25], %33 {strides = array<i32>} : memref<1x1x16xf32, #tpu.memory_space<vmem>>, vector<1x1x16xf32>,
    return
  }
  func.func @transform_0(%arg0: i32) -> (i32, i32) {
    %c0_i32 = arith.constant 0 : i32
    %c0_i32_0 = arith.constant 0 : i32
    return %arg0, %c0_i32 : i32, i32
  }
  func.func @transform_1(%arg0: i32) -> (i32, i32) {
    %c0_i32 = arith.constant 0 : i32
    %c0_i32_0 = arith.constant 0 : i32
    %c0_i32_1 = arith.constant 0 : i32
    return %c0_i32, %c0_i32_0 : i32, i32
  }
  func.func @transform_2(%arg0: i32) -> (i32, i32) {
    %c0_i32 = arith.constant 0 : i32
    %c0_i32_0 = arith.constant 0 : i32
    %c0_i32_1 = arith.constant 0 : i32
    return %c0_i32, %c0_i32_0 : i32, i32
  }
  func.func @transform_3(%arg0: i32) -> (i32, i32) {
    %c0_i32 = arith.constant 0 : i32
    %c0_i32_0 = arith.constant 0 : i32
    %c0_i32_1 = arith.constant 0 : i32
    return %c0_i32, %c0_i32_0 : i32, i32
  }
  func.func @transform_4(%arg0: i32) -> (i32, i32) {
    %c0_i32 = arith.constant 0 : i32
    %c0_i32_0 = arith.constant 0 : i32
    %c0_i32_1 = arith.constant 0 : i32
    return %c0_i32, %c0_i32_0 : i32, i32
  }
  func.func @transform_5(%arg0: i32) -> (i32, i32) {
    %c0_i32 = arith.constant 0 : i32
    %c0_i32_0 = arith.constant 0 : i32
    %c0_i32_1 = arith.constant 0 : i32
    return %c0_i32, %c0_i32_0 : i32, i32
  }
  func.func @transform_6(%arg0: i32) -> (i32, i32) {
    %c0_i32 = arith.constant 0 : i32
    %c0_i32_0 = arith.constant 0 : i32
    %c0_i32_1 = arith.constant 0 : i32
    return %c0_i32, %c0_i32_0 : i32, i32
  }
  func.func @transform_7(%arg0: i32) -> (i32, i32) {
    %c0_i32 = arith.constant 0 : i32
    %c0_i32_0 = arith.constant 0 : i32
    %c0_i32_1 = arith.constant 0 : i32
    return %c0_i32, %c0_i32_0 : i32, i32
  }
  func.func @transform_8(%arg0: i32) -> (i32, i32) {
    %c0_i32 = arith.constant 0 : i32
    %c0_i32_0 = arith.constant 0 : i32
    %c0_i32_1 = arith.constant 0 : i32
    return %c0_i32, %c0_i32_0 : i32, i32
  }
  func.func @transform_9(%arg0: i32) -> (i32, i32, i32) {
    %c0_i32 = arith.constant 0 : i32
    %c0_i32_0 = arith.constant 0 : i32
    %c0_i32_1 = arith.constant 0 : i32
    return %arg0, %c0_i32, %c0_i32_0 : i32, i32, i32
  }
}

</mosaic_0001>

<llo_original>
// kernel: tpu_custom_call.1
$region0: #{tpu_custom_call.1}
  #allocation0 [shape = 'u32[]', space=smem, size = 0x4, offset = 0x4, fixed_abs, tag = 'smem constant byte address 0x4 - core index']
  #allocation1 [shape = 'u32[144,128]{1,0:T(1,128)}', space=vmem, size = 0x12000, scoped, tag = 'internal scratch']
  #allocation2 [shape = 'f32[1,1]{1,0:T(1,128)S(6)}', space=smem, size = 0x200, scoped, tag = 'scoped memory for tpu_custom_call.1']
  %s0 = inlined_call_operand.hbm [shape: f32[16,32], index: 0, kind: input, shape index: {}]
  %s1 = inlined_call_operand.hbm [shape: bf16[32,512], index: 1, kind: input, shape index: {}]
  %s2 = inlined_call_operand.vmem [shape: f32[1,512], index: 2, kind: input, shape index: {}]
  %s3 = inlined_call_operand.hbm [shape: bf16[512,128], index: 3, kind: input, shape index: {}]
  %s4 = inlined_call_operand.vmem [shape: f32[1,128], index: 4, kind: input, shape index: {}]
  %s5 = inlined_call_operand.hbm [shape: bf16[128,128], index: 5, kind: input, shape index: {}]
  %s6 = inlined_call_operand.vmem [shape: f32[1,128], index: 6, kind: input, shape index: {}]
  %s7 = inlined_call_operand.vmem [shape: bf16[1,128], index: 7, kind: input, shape index: {}]
  %s8 = inlined_call_operand.<no memory space> [shape: f32[1,1], index: 8, kind: input, shape index: {}]
  %s9 = inlined_call_operand.hbm [shape: f32[1,1,16], index: 9, kind: output, shape index: {}]
  %s10 = sld [smem:[#allocation0]]
  $region62: #{tpu_custom_call.1} parent=0
    _
  %s12 = ssub.s32 1, %s10
  %s13 = scalar_select 0, %s12, %s10
  %14 = sst [smem:[#allocation2]] %s8
  $region1: #{tpu_custom_call.1} parent=0
    #allocation3 [shape = 'u8[8192]{0}', space=vmem, size = 0x2000, scoped, tag = 'input window, operand 0, single buffered']
    #allocation4 [shape = 's32[1]{0}', space=sflag, size = 0x4, scoped, tag = 'scoped memory for tpu_custom_call.1']
    #allocation5 [shape = 's32[1]{0}', space=sflag, size = 0x4, scoped, tag = 'scoped memory for tpu_custom_call.1']
    #allocation6 [shape = 'u8[32768]{0}', space=vmem, size = 0x8000, scoped, tag = 'input window, operand 1, single buffered']
    #allocation7 [shape = 's32[1]{0}', space=sflag, size = 0x4, scoped, tag = 'scoped memory for tpu_custom_call.1']
    #allocation8 [shape = 'u8[131072]{0}', space=vmem, size = 0x20000, scoped, tag = 'input window, operand 3, single buffered']
    #allocation9 [shape = 'u8[32768]{0}', space=vmem, size = 0x8000, scoped, tag = 'input window, operand 5, single buffered']
    #allocation10 [shape = 's32[1]{0}', space=sflag, size = 0x4, scoped, tag = 'scoped memory for tpu_custom_call.1']
    #allocation11 [shape = 'u8[512]{0}', space=vmem, size = 0x400, scoped, tag = 'output window, operand 0, single buffered']
    %15 = vsyncpa [#allocation4], 0
    %16 = vsyncpa [#allocation7], 0
    %17 = vsyncpa [#allocation10], 0
    %18 = vsyncpa [#allocation5], 0
    // Predicated region
    $region2: #{tpu_custom_call.1} parent=1 // pred_check
      _
    $region3: #{tpu_custom_call.1} parent=1 // pred_check_branch
      %20 = sbr.rel (0) target = $region5
    $region4: #{tpu_custom_call.1} parent=1 // pred_region
      %s22 = ssub.s32 256, 256
      %23 = vsyncadd [#allocation4], %s22
      %s24 = sshll.u32 [#allocation3], 4
      %s25 = int_to_ptr.vmem [resolvable:$true] %s24
      %30 = dma.hbm_to_vmem [thread:$0]  %s0, 256, %s25, [#allocation4], 128, 128, 8
    $region5: #{tpu_custom_call.1} parent=1 // pred_fallthru
      _
    // Predicated region
    $region6: #{tpu_custom_call.1} parent=1 // pred_check
      _
    $region7: #{tpu_custom_call.1} parent=1 // pred_check_branch
      %32 = sbr.rel (0) target = $region9
    $region8: #{tpu_custom_call.1} parent=1 // pred_region
      %s34 = ssub.s32 1024, 1024
      %35 = vsyncadd [#allocation7], %s34
      %s36 = sshll.u32 [#allocation6], 4
      %s37 = int_to_ptr.vmem [resolvable:$true] %s36
      %42 = dma.hbm_to_vmem [thread:$0]  %s1, 1024, %s37, [#allocation7], 256, 256, 16
    $region9: #{tpu_custom_call.1} parent=1 // pred_fallthru
      _
    // Predicated region
    $region10: #{tpu_custom_call.1} parent=1 // pred_check
      _
    $region11: #{tpu_custom_call.1} parent=1 // pred_check_branch
      %44 = sbr.rel (0) target = $region13
    $region12: #{tpu_custom_call.1} parent=1 // pred_region
      _
    $region13: #{tpu_custom_call.1} parent=1 // pred_fallthru
      _
    // Predicated region
    $region14: #{tpu_custom_call.1} parent=1 // pred_check
      _
    $region15: #{tpu_custom_call.1} parent=1 // pred_check_branch
      %46 = sbr.rel (0) target = $region17
    $region16: #{tpu_custom_call.1} parent=1 // pred_region
      %s48 = ssub.s32 4096, 4096
      %49 = vsyncadd [#allocation7], %s48
      %s50 = sshll.u32 [#allocation8], 4
      %s51 = int_to_ptr.vmem [resolvable:$true] %s50
      %56 = dma.hbm_to_vmem [thread:$0]  %s3, 4096, %s51, [#allocation7], 64, 64, 4
    $region17: #{tpu_custom_call.1} parent=1 // pred_fallthru
      _
    // Predicated region
    $region18: #{tpu_custom_call.1} parent=1 // pred_check
      _
    $region19: #{tpu_custom_call.1} parent=1 // pred_check_branch
      %58 = sbr.rel (0) target = $region21
    $region20: #{tpu_custom_call.1} parent=1 // pred_region
      _
    $region21: #{tpu_custom_call.1} parent=1 // pred_fallthru
      _
    // Predicated region
    $region22: #{tpu_custom_call.1} parent=1 // pred_check
      _
    $region23: #{tpu_custom_call.1} parent=1 // pred_check_branch
      %60 = sbr.rel (0) target = $region25
    $region24: #{tpu_custom_call.1} parent=1 // pred_region
      %s62 = ssub.s32 1024, 1024
      %63 = vsyncadd [#allocation10], %s62
      %s64 = sshll.u32 [#allocation9], 4
      %s65 = int_to_ptr.vmem [resolvable:$true] %s64
      %70 = dma.hbm_to_vmem [thread:$0]  %s5, 1024, %s65, [#allocation10], 64, 64, 4
    $region25: #{tpu_custom_call.1} parent=1 // pred_fallthru
      _
    // Predicated region
    $region26: #{tpu_custom_call.1} parent=1 // pred_check
      _
    $region27: #{tpu_custom_call.1} parent=1 // pred_check_branch
      %72 = sbr.rel (0) target = $region29
    $region28: #{tpu_custom_call.1} parent=1 // pred_region
      _
    $region29: #{tpu_custom_call.1} parent=1 // pred_fallthru
      _
    // Predicated region
    $region30: #{tpu_custom_call.1} parent=1 // pred_check
      _
    $region31: #{tpu_custom_call.1} parent=1 // pred_check_branch
      %74 = sbr.rel (0) target = $region33
    $region32: #{tpu_custom_call.1} parent=1 // pred_region
      _
    $region33: #{tpu_custom_call.1} parent=1 // pred_fallthru
      _
    // Predicated region
    $region34: #{tpu_custom_call.1} parent=1 // pred_check
      _
    $region35: #{tpu_custom_call.1} parent=1 // pred_check_branch
      %76 = sbr.rel (0) target = $region37
    $region36: #{tpu_custom_call.1} parent=1 // pred_region
      _
    $region37: #{tpu_custom_call.1} parent=1 // pred_fallthru
      _
    // Predicated region
    $region38: #{tpu_custom_call.1} parent=1 // pred_check
      _
    $region39: #{tpu_custom_call.1} parent=1 // pred_check_branch
      %78 = sbr.rel (0) target = $region41
    $region40: #{tpu_custom_call.1} parent=1 // pred_region
      %79 = dma.done [#allocation4], 256
    $region41: #{tpu_custom_call.1} parent=1 // pred_fallthru
      _
    // Predicated region
    $region42: #{tpu_custom_call.1} parent=1 // pred_check
      _
    $region43: #{tpu_custom_call.1} parent=1 // pred_check_branch
      %81 = sbr.rel (0) target = $region45
    $region44: #{tpu_custom_call.1} parent=1 // pred_region
      %82 = dma.done [#allocation7], 1024
    $region45: #{tpu_custom_call.1} parent=1 // pred_fallthru
      _
    // Predicated region
    $region46: #{tpu_custom_call.1} parent=1 // pred_check
      _
    $region47: #{tpu_custom_call.1} parent=1 // pred_check_branch
      %84 = sbr.rel (0) target = $region49
    $region48: #{tpu_custom_call.1} parent=1 // pred_region
      %85 = dma.done [#allocation7], 4096
    $region49: #{tpu_custom_call.1} parent=1 // pred_fallthru
      _
    // Predicated region
    $region50: #{tpu_custom_call.1} parent=1 // pred_check
      _
    $region51: #{tpu_custom_call.1} parent=1 // pred_check_branch
      %87 = sbr.rel (0) target = $region53
    $region52: #{tpu_custom_call.1} parent=1 // pred_region
      %88 = dma.done [#allocation10], 1024
    $region53: #{tpu_custom_call.1} parent=1 // pred_fallthru
      _
    %v90 = vld [vmem:[#allocation3] sm:$0xff]
    %v91 = vld [vmem:[#allocation3 + $0x8] sm:$0xff]
    %v92 = vpack.c.bf16 %v91, %v90
    %v93 = vld [vmem:[#allocation6] sm:$0xff]
    %v94 = vld [vmem:[#allocation6 + $0x8] sm:$0xff]
    %v95 = vld [vmem:[#allocation6 + $0x10] sm:$0xff]
    %v96 = vld [vmem:[#allocation6 + $0x18] sm:$0xff]
    %v97 = vld [vmem:[#allocation6 + $0x20] sm:$0xff]
    %v98 = vld [vmem:[#allocation6 + $0x28] sm:$0xff]
    %v99 = vld [vmem:[#allocation6 + $0x30] sm:$0xff]
    %v100 = vld [vmem:[#allocation6 + $0x38] sm:$0xff]
    %v101 = vld [vmem:[%s2] sm:$0xf]
    %v103 = vlaneseq
    %v104 = vshrl.u32 %v103, 7
    %v105 = vsub.s32 0, %v104
    %v106 = vrot.slane %v101, %v105
    %v107 = vlaneseq
    %v108 = vshrl.u32 %v107, 7
    %v109 = vsub.s32 1, %v108
    %v110 = vrot.slane %v101, %v109
    %v111 = vlaneseq
    %v112 = vshrl.u32 %v111, 7
    %v113 = vsub.s32 2, %v112
    %v114 = vrot.slane %v101, %v113
    %v115 = vlaneseq
    %v116 = vshrl.u32 %v115, 7
    %v117 = vsub.s32 3, %v116
    %v118 = vrot.slane %v101, %v117
    %v131 = vunpack.c.l.b16 %v93
    %v132 = vunpack.c.h.b16 %v93
    %v133 = vunpack.c.l.b16 %v94
    %v134 = vunpack.c.h.b16 %v94
    %v135 = vunpack.c.l.b16 %v95
    %v136 = vunpack.c.h.b16 %v95
    %v137 = vunpack.c.l.b16 %v96
    %v138 = vunpack.c.h.b16 %v96
    %v139 = vunpack.c.l.b16 %v97
    %v140 = vunpack.c.h.b16 %v97
    %v141 = vunpack.c.l.b16 %v98
    %v142 = vunpack.c.h.b16 %v98
    %v143 = vunpack.c.l.b16 %v99
    %v144 = vunpack.c.h.b16 %v99
    %v145 = vunpack.c.l.b16 %v100
    %v146 = vunpack.c.h.b16 %v100
    %v147 = vpack.c.b16 %v135, %v131
    %v148 = vpack.c.b16 %v136, %v132
    %v149 = vpack.c.b16 %v137, %v133
    %v150 = vpack.c.b16 %v138, %v134
    %v151 = vpack.c.b16 %v143, %v139
    %v152 = vpack.c.b16 %v144, %v140
    %v153 = vpack.c.b16 %v145, %v141
    %v154 = vpack.c.b16 %v146, %v142
    %vm163 = vcmask 261120
    %v165 = vsel %vm163, %v92, 0
    %167 = vmatprep.subr.bf16.mxu0 %v148
    %168 = vmatpush1.bf16.msra.mxu0 %v147
    %169 = vmatprep.subr.bf16.mxu0 %v152
    %170 = vmatpush1.bf16.msra.mxu0 %v151
    %171 = vmatprep.subr.bf16.mxu0 0
    %172 = vmatpush1.bf16.msra.mxu0 0
    %173 = vmatprep.subr.bf16.mxu0 0
    %174 = vmatpush1.bf16.msra.mxu0 0
    %175 = vmatprep.subr.bf16.mxu0 0
    %176 = vmatpush1.bf16.msra.mxu0 0
    %177 = vmatprep.subr.bf16.mxu0 0
    %178 = vmatpush1.bf16.msra.mxu0 0
    %179 = vmatprep.subr.bf16.mxu0 0
    %180 = vmatpush1.bf16.msra.mxu0 0
    %181 = vmatprep.subr.bf16.mxu0 0
    %182 = vmatpush1.bf16.msra.mxu0 0
    %183 = vmatprep.subr.bf16.mxu0 0
    %184 = vmatpush1.bf16.msra.mxu0 0
    %185 = vmatprep.subr.bf16.mxu0 0
    %186 = vmatpush1.bf16.msra.mxu0 0
    %187 = vmatprep.subr.bf16.mxu0 0
    %188 = vmatpush1.bf16.msra.mxu0 0
    %189 = vmatprep.subr.bf16.mxu0 0
    %190 = vmatpush1.bf16.msra.mxu0 0
    %191 = vmatprep.subr.bf16.mxu0 0
    %192 = vmatpush1.bf16.msra.mxu0 0
    %193 = vmatprep.subr.bf16.mxu0 0
    %194 = vmatpush1.bf16.msra.mxu0 0
    %195 = vmatprep.subr.bf16.mxu0 0
    %196 = vmatpush1.bf16.msra.mxu0 0
    %197 = vmatprep.subr.bf16.mxu0 0
    %198 = vmatpush1.bf16.msra.mxu0 0
    %199 = vmatprep.mubr.bf16.mxu0 0
    %200 = vmatmul.mubr.bf16.gmra.mrb[0].mxu0 %v165
    %v201 = vpop.f32.mrb[0].mxu0
    %v202 = vadd.f32 %v106, %v201
    %v203 = vpop.f32.mrb[0].mxu0
    %v204 = vadd.f32 %v110, %v203
    %v205 = vpop.f32.mrb[0].mxu0
    %v206 = vadd.f32 %v106, %v205
    %v207 = vpop.f32.mrb[0].mxu0
    %v208 = vadd.f32 %v110, %v207
    %209 = vdwg.mxu0
    %210 = vmatprep.subr.bf16.mxu0 %v150
    %211 = vmatpush1.bf16.msra.mxu0 %v149
    %212 = vmatprep.subr.bf16.mxu0 %v154
    %213 = vmatpush1.bf16.msra.mxu0 %v153
    %214 = vmatprep.subr.bf16.mxu0 0
    %215 = vmatpush1.bf16.msra.mxu0 0
    %216 = vmatprep.subr.bf16.mxu0 0
    %217 = vmatpush1.bf16.msra.mxu0 0
    %218 = vmatprep.subr.bf16.mxu0 0
    %219 = vmatpush1.bf16.msra.mxu0 0
    %220 = vmatprep.subr.bf16.mxu0 0
    %221 = vmatpush1.bf16.msra.mxu0 0
    %222 = vmatprep.subr.bf16.mxu0 0
    %223 = vmatpush1.bf16.msra.mxu0 0
    %224 = vmatprep.subr.bf16.mxu0 0
    %225 = vmatpush1.bf16.msra.mxu0 0
    %226 = vmatprep.subr.bf16.mxu0 0
    %227 = vmatpush1.bf16.msra.mxu0 0
    %228 = vmatprep.subr.bf16.mxu0 0
    %229 = vmatpush1.bf16.msra.mxu0 0
    %230 = vmatprep.subr.bf16.mxu0 0
    %231 = vmatpush1.bf16.msra.mxu0 0
    %232 = vmatprep.subr.bf16.mxu0 0
    %233 = vmatpush1.bf16.msra.mxu0 0
    %234 = vmatprep.subr.bf16.mxu0 0
    %235 = vmatpush1.bf16.msra.mxu0 0
    %236 = vmatprep.subr.bf16.mxu0 0
    %237 = vmatpush1.bf16.msra.mxu0 0
    %238 = vmatprep.subr.bf16.mxu0 0
    %239 = vmatpush1.bf16.msra.mxu0 0
    %240 = vmatprep.subr.bf16.mxu0 0
    %241 = vmatpush1.bf16.msra.mxu0 0
    %242 = vmatprep.mubr.bf16.mxu0 0
    %243 = vmatmul.mubr.bf16.gmra.mrb[0].mxu0 %v165
    %v244 = vpop.f32.mrb[0].mxu0
    %v245 = vadd.f32 %v114, %v244
    %v246 = vpop.f32.mrb[0].mxu0
    %v247 = vadd.f32 %v118, %v246
    %v248 = vpop.f32.mrb[0].mxu0
    %v249 = vadd.f32 %v114, %v248
    %v250 = vpop.f32.mrb[0].mxu0
    %v251 = vadd.f32 %v118, %v250
    %252 = vdwg.mxu0
    %v253 = vmax.f32 %v202, 0.0
    %v254 = vmax.f32 %v204, 0.0
    %v255 = vmax.f32 %v245, 0.0
    %v256 = vmax.f32 %v247, 0.0
    %v257 = vmax.f32 %v206, 0.0
    %v258 = vmax.f32 %v208, 0.0
    %v259 = vmax.f32 %v249, 0.0
    %v260 = vmax.f32 %v251, 0.0
    %v261 = vpack.c.bf16 %v257, %v253
    %v262 = vpack.c.bf16 %v258, %v254
    %v263 = vpack.c.bf16 %v259, %v255
    %v264 = vpack.c.bf16 %v260, %v256
    %v265 = vld [vmem:[#allocation8] sm:$0xf]
    %v266 = vld [vmem:[#allocation8 + $0x4] sm:$0xf]
    %v267 = vld [vmem:[#allocation8 + $0x8] sm:$0xf]
    %v268 = vld [vmem:[#allocation8 + $0xc] sm:$0xf]
    %v269 = vld [vmem:[#allocation8 + $0x10] sm:$0xf]
    %v270 = vld [vmem:[#allocation8 + $0x14] sm:$0xf]
    %v271 = vld [vmem:[#allocation8 + $0x18] sm:$0xf]
    %v272 = vld [vmem:[#allocation8 + $0x1c] sm:$0xf]
    %v273 = vld [vmem:[#allocation8 + $0x20] sm:$0xf]
    %v274 = vld [vmem:[#allocation8 + $0x24] sm:$0xf]
    %v275 = vld [vmem:[#allocation8 + $0x28] sm:$0xf]
    %v276 = vld [vmem:[#allocation8 + $0x2c] sm:$0xf]
    %v277 = vld [vmem:[#allocation8 + $0x30] sm:$0xf]
    %v278 = vld [vmem:[#allocation8 + $0x34] sm:$0xf]
    %v279 = vld [vmem:[#allocation8 + $0x38] sm:$0xf]
    %v280 = vld [vmem:[#allocation8 + $0x3c] sm:$0xf]
    %v281 = vld [vmem:[#allocation8 + $0x40] sm:$0xf]
    %v282 = vld [vmem:[#allocation8 + $0x44] sm:$0xf]
    %v283 = vld [vmem:[#allocation8 + $0x48] sm:$0xf]
    %v284 = vld [vmem:[#allocation8 + $0x4c] sm:$0xf]
    %v285 = vld [vmem:[#allocation8 + $0x50] sm:$0xf]
    %v286 = vld [vmem:[#allocation8 + $0x54] sm:$0xf]
    %v287 = vld [vmem:[#allocation8 + $0x58] sm:$0xf]
    %v288 = vld [vmem:[#allocation8 + $0x5c] sm:$0xf]
    %v289 = vld [vmem:[#allocation8 + $0x60] sm:$0xf]
    %v290 = vld [vmem:[#allocation8 + $0x64] sm:$0xf]
    %v291 = vld [vmem:[#allocation8 + $0x68] sm:$0xf]
    %v292 = vld [vmem:[#allocation8 + $0x6c] sm:$0xf]
    %v293 = vld [vmem:[#allocation8 + $0x70] sm:$0xf]
    %v294 = vld [vmem:[#allocation8 + $0x74] sm:$0xf]
    %v295 = vld [vmem:[#allocation8 + $0x78] sm:$0xf]
    %v296 = vld [vmem:[#allocation8 + $0x7c] sm:$0xf]
    %v297 = vld [vmem:[#allocation8 + $0x80] sm:$0xf]
    %v298 = vld [vmem:[#allocation8 + $0x84] sm:$0xf]
    %v299 = vld [vmem:[#allocation8 + $0x88] sm:$0xf]
    %v300 = vld [vmem:[#allocation8 + $0x8c] sm:$0xf]
    %v301 = vld [vmem:[#allocation8 + $0x90] sm:$0xf]
    %v302 = vld [vmem:[#allocation8 + $0x94] sm:$0xf]
    %v303 = vld [vmem:[#allocation8 + $0x98] sm:$0xf]
    %v304 = vld [vmem:[#allocation8 + $0x9c] sm:$0xf]
    %v305 = vld [vmem:[#allocation8 + $0xa0] sm:$0xf]
    %v306 = vld [vmem:[#allocation8 + $0xa4] sm:$0xf]
    %v307 = vld [vmem:[#allocation8 + $0xa8] sm:$0xf]
    %v308 = vld [vmem:[#allocation8 + $0xac] sm:$0xf]
    %v309 = vld [vmem:[#allocation8 + $0xb0] sm:$0xf]
    %v310 = vld [vmem:[#allocation8 + $0xb4] sm:$0xf]
    %v311 = vld [vmem:[#allocation8 + $0xb8] sm:$0xf]
    %v312 = vld [vmem:[#allocation8 + $0xbc] sm:$0xf]
    %v313 = vld [vmem:[#allocation8 + $0xc0] sm:$0xf]
    %v314 = vld [vmem:[#allocation8 + $0xc4] sm:$0xf]
    %v315 = vld [vmem:[#allocation8 + $0xc8] sm:$0xf]
    %v316 = vld [vmem:[#allocation8 + $0xcc] sm:$0xf]
    %v317 = vld [vmem:[#allocation8 + $0xd0] sm:$0xf]
    %v318 = vld [vmem:[#allocation8 + $0xd4] sm:$0xf]
    %v319 = vld [vmem:[#allocation8 + $0xd8] sm:$0xf]
    %v320 = vld [vmem:[#allocation8 + $0xdc] sm:$0xf]
    %v321 = vld [vmem:[#allocation8 + $0xe0] sm:$0xf]
    %v322 = vld [vmem:[#allocation8 + $0xe4] sm:$0xf]
    %v323 = vld [vmem:[#allocation8 + $0xe8] sm:$0xf]
    %v324 = vld [vmem:[#allocation8 + $0xec] sm:$0xf]
    %v325 = vld [vmem:[#allocation8 + $0xf0] sm:$0xf]
    %v326 = vld [vmem:[#allocation8 + $0xf4] sm:$0xf]
    %v327 = vld [vmem:[#allocation8 + $0xf8] sm:$0xf]
    %v328 = vld [vmem:[#allocation8 + $0xfc] sm:$0xf]
    %v329 = vld [vmem:[%s4] sm:$0x1]
    %v331 = vlaneseq
    %v332 = vshrl.u32 %v331, 7
    %v333 = vsub.s32 0, %v332
    %v334 = vrot.slane %v329, %v333
    %v400 = vunpack.c.l.b16 %v265
    %v401 = vunpack.c.l.b16 %v266
    %v402 = vunpack.c.l.b16 %v267
    %v403 = vunpack.c.l.b16 %v268
    %v404 = vunpack.c.l.b16 %v269
    %v405 = vunpack.c.l.b16 %v270
    %v406 = vunpack.c.l.b16 %v271
    %v407 = vunpack.c.l.b16 %v272
    %v408 = vunpack.c.l.b16 %v273
    %v409 = vunpack.c.l.b16 %v274
    %v410 = vunpack.c.l.b16 %v275
    %v411 = vunpack.c.l.b16 %v276
    %v412 = vunpack.c.l.b16 %v277
    %v413 = vunpack.c.l.b16 %v278
    %v414 = vunpack.c.l.b16 %v279
    %v415 = vunpack.c.l.b16 %v280
    %v416 = vunpack.c.l.b16 %v281
    %v417 = vunpack.c.l.b16 %v282
    %v418 = vunpack.c.l.b16 %v283
    %v419 = vunpack.c.l.b16 %v284
    %v420 = vunpack.c.l.b16 %v285
    %v421 = vunpack.c.l.b16 %v286
    %v422 = vunpack.c.l.b16 %v287
    %v423 = vunpack.c.l.b16 %v288
    %v424 = vunpack.c.l.b16 %v289
    %v425 = vunpack.c.l.b16 %v290
    %v426 = vunpack.c.l.b16 %v291
    %v427 = vunpack.c.l.b16 %v292
    %v428 = vunpack.c.l.b16 %v293
    %v429 = vunpack.c.l.b16 %v294
    %v430 = vunpack.c.l.b16 %v295
    %v431 = vunpack.c.l.b16 %v296
    %v432 = vunpack.c.l.b16 %v297
    %v433 = vunpack.c.l.b16 %v298
    %v434 = vunpack.c.l.b16 %v299
    %v435 = vunpack.c.l.b16 %v300
    %v436 = vunpack.c.l.b16 %v301
    %v437 = vunpack.c.l.b16 %v302
    %v438 = vunpack.c.l.b16 %v303
    %v439 = vunpack.c.l.b16 %v304
    %v440 = vunpack.c.l.b16 %v305
    %v441 = vunpack.c.l.b16 %v306
    %v442 = vunpack.c.l.b16 %v307
    %v443 = vunpack.c.l.b16 %v308
    %v444 = vunpack.c.l.b16 %v309
    %v445 = vunpack.c.l.b16 %v310
    %v446 = vunpack.c.l.b16 %v311
    %v447 = vunpack.c.l.b16 %v312
    %v448 = vunpack.c.l.b16 %v313
    %v449 = vunpack.c.l.b16 %v314
    %v450 = vunpack.c.l.b16 %v315
    %v451 = vunpack.c.l.b16 %v316
    %v452 = vunpack.c.l.b16 %v317
    %v453 = vunpack.c.l.b16 %v318
    %v454 = vunpack.c.l.b16 %v319
    %v455 = vunpack.c.l.b16 %v320
    %v456 = vunpack.c.l.b16 %v321
    %v457 = vunpack.c.l.b16 %v322
    %v458 = vunpack.c.l.b16 %v323
    %v459 = vunpack.c.l.b16 %v324
    %v460 = vunpack.c.l.b16 %v325
    %v461 = vunpack.c.l.b16 %v326
    %v462 = vunpack.c.l.b16 %v327
    %v463 = vunpack.c.l.b16 %v328
    %v464 = vpack.c.b16 %v401, %v400
    %v465 = vpack.c.b16 %v403, %v402
    %v466 = vpack.c.b16 %v405, %v404
    %v467 = vpack.c.b16 %v407, %v406
    %v468 = vpack.c.b16 %v409, %v408
    %v469 = vpack.c.b16 %v411, %v410
    %v470 = vpack.c.b16 %v413, %v412
    %v471 = vpack.c.b16 %v415, %v414
    %v472 = vpack.c.b16 %v417, %v416
    %v473 = vpack.c.b16 %v419, %v418
    %v474 = vpack.c.b16 %v421, %v420
    %v475 = vpack.c.b16 %v423, %v422
    %v476 = vpack.c.b16 %v425, %v424
    %v477 = vpack.c.b16 %v427, %v426
    %v478 = vpack.c.b16 %v429, %v428
    %v479 = vpack.c.b16 %v431, %v430
    %v480 = vpack.c.b16 %v433, %v432
    %v481 = vpack.c.b16 %v435, %v434
    %v482 = vpack.c.b16 %v437, %v436
    %v483 = vpack.c.b16 %v439, %v438
    %v484 = vpack.c.b16 %v441, %v440
    %v485 = vpack.c.b16 %v443, %v442
    %v486 = vpack.c.b16 %v445, %v444
    %v487 = vpack.c.b16 %v447, %v446
    %v488 = vpack.c.b16 %v449, %v448
    %v489 = vpack.c.b16 %v451, %v450
    %v490 = vpack.c.b16 %v453, %v452
    %v491 = vpack.c.b16 %v455, %v454
    %v492 = vpack.c.b16 %v457, %v456
    %v493 = vpack.c.b16 %v459, %v458
    %v494 = vpack.c.b16 %v461, %v460
    %v495 = vpack.c.b16 %v463, %v462
    %528 = vmatprep.subr.bf16.mxu0 0
    %529 = vmatpush1.bf16.msra.mxu0 %v464
    %530 = vmatprep.subr.bf16.mxu0 0
    %531 = vmatpush1.bf16.msra.mxu0 %v465
    %532 = vmatprep.subr.bf16.mxu0 0
    %533 = vmatpush1.bf16.msra.mxu0 %v466
    %534 = vmatprep.subr.bf16.mxu0 0
    %535 = vmatpush1.bf16.msra.mxu0 %v467
    %536 = vmatprep.subr.bf16.mxu0 0
    %537 = vmatpush1.bf16.msra.mxu0 %v468
    %538 = vmatprep.subr.bf16.mxu0 0
    %539 = vmatpush1.bf16.msra.mxu0 %v469
    %540 = vmatprep.subr.bf16.mxu0 0
    %541 = vmatpush1.bf16.msra.mxu0 %v470
    %542 = vmatprep.subr.bf16.mxu0 0
    %543 = vmatpush1.bf16.msra.mxu0 %v471
    %544 = vmatprep.subr.bf16.mxu0 0
    %545 = vmatpush1.bf16.msra.mxu0 %v472
    %546 = vmatprep.subr.bf16.mxu0 0
    %547 = vmatpush1.bf16.msra.mxu0 %v473
    %548 = vmatprep.subr.bf16.mxu0 0
    %549 = vmatpush1.bf16.msra.mxu0 %v474
    %550 = vmatprep.subr.bf16.mxu0 0
    %551 = vmatpush1.bf16.msra.mxu0 %v475
    %552 = vmatprep.subr.bf16.mxu0 0
    %553 = vmatpush1.bf16.msra.mxu0 %v476
    %554 = vmatprep.subr.bf16.mxu0 0
    %555 = vmatpush1.bf16.msra.mxu0 %v477
    %556 = vmatprep.subr.bf16.mxu0 0
    %557 = vmatpush1.bf16.msra.mxu0 %v478
    %558 = vmatprep.subr.bf16.mxu0 0
    %559 = vmatpush1.bf16.msra.mxu0 %v479
    %560 = vmatprep.mubr.bf16.mxu0 %v262
    %561 = vmatmul.mubr.bf16.gmra.mrb[0].mxu0 %v261
    %v562 = vpop.f32.mrb[0].mxu0
    %v563 = vadd.f32 %v334, %v562
    %v564 = vpop.f32.mrb[0].mxu0
    %v565 = vpop.f32.mrb[0].mxu0
    %v566 = vadd.f32 %v334, %v565
    %v567 = vpop.f32.mrb[0].mxu0
    %568 = vdwg.mxu0
    %569 = vmatprep.subr.bf16.mxu0 0
    %570 = vmatpush1.bf16.msra.mxu0 %v480
    %571 = vmatprep.subr.bf16.mxu0 0
    %572 = vmatpush1.bf16.msra.mxu0 %v481
    %573 = vmatprep.subr.bf16.mxu0 0
    %574 = vmatpush1.bf16.msra.mxu0 %v482
    %575 = vmatprep.subr.bf16.mxu0 0
    %576 = vmatpush1.bf16.msra.mxu0 %v483
    %577 = vmatprep.subr.bf16.mxu0 0
    %578 = vmatpush1.bf16.msra.mxu0 %v484
    %579 = vmatprep.subr.bf16.mxu0 0
    %580 = vmatpush1.bf16.msra.mxu0 %v485
    %581 = vmatprep.subr.bf16.mxu0 0
    %582 = vmatpush1.bf16.msra.mxu0 %v486
    %583 = vmatprep.subr.bf16.mxu0 0
    %584 = vmatpush1.bf16.msra.mxu0 %v487
    %585 = vmatprep.subr.bf16.mxu0 0
    %586 = vmatpush1.bf16.msra.mxu0 %v488
    %587 = vmatprep.subr.bf16.mxu0 0
    %588 = vmatpush1.bf16.msra.mxu0 %v489
    %589 = vmatprep.subr.bf16.mxu0 0
    %590 = vmatpush1.bf16.msra.mxu0 %v490
    %591 = vmatprep.subr.bf16.mxu0 0
    %592 = vmatpush1.bf16.msra.mxu0 %v491
    %593 = vmatprep.subr.bf16.mxu0 0
    %594 = vmatpush1.bf16.msra.mxu0 %v492
    %595 = vmatprep.subr.bf16.mxu0 0
    %596 = vmatpush1.bf16.msra.mxu0 %v493
    %597 = vmatprep.subr.bf16.mxu0 0
    %598 = vmatpush1.bf16.msra.mxu0 %v494
    %599 = vmatprep.subr.bf16.mxu0 0
    %600 = vmatpush1.bf16.msra.mxu0 %v495
    %601 = vmatprep.mubr.bf16.mxu0 %v264
    %602 = vmatmul.mubr.bf16.gmra.mrb[0].mxu0 %v263
    %v603 = vpop.f32.mrb[0].mxu0
    %v604 = vadd.f32 %v563, %v603
    %v605 = vpop.f32.mrb[0].mxu0
    %v606 = vpop.f32.mrb[0].mxu0
    %v607 = vadd.f32 %v566, %v606
    %v608 = vpop.f32.mrb[0].mxu0
    %609 = vdwg.mxu0
    %v610 = vmax.f32 %v604, 0.0
    %v611 = vmax.f32 %v607, 0.0
    %v612 = vpack.c.bf16 %v611, %v610
    %v613 = vld [vmem:[#allocation9] sm:$0xf]
    %v614 = vld [vmem:[#allocation9 + $0x4] sm:$0xf]
    %v615 = vld [vmem:[#allocation9 + $0x8] sm:$0xf]
    %v616 = vld [vmem:[#allocation9 + $0xc] sm:$0xf]
    %v617 = vld [vmem:[#allocation9 + $0x10] sm:$0xf]
    %v618 = vld [vmem:[#allocation9 + $0x14] sm:$0xf]
    %v619 = vld [vmem:[#allocation9 + $0x18] sm:$0xf]
    %v620 = vld [vmem:[#allocation9 + $0x1c] sm:$0xf]
    %v621 = vld [vmem:[#allocation9 + $0x20] sm:$0xf]
    %v622 = vld [vmem:[#allocation9 + $0x24] sm:$0xf]
    %v623 = vld [vmem:[#allocation9 + $0x28] sm:$0xf]
    %v624 = vld [vmem:[#allocation9 + $0x2c] sm:$0xf]
    %v625 = vld [vmem:[#allocation9 + $0x30] sm:$0xf]
    %v626 = vld [vmem:[#allocation9 + $0x34] sm:$0xf]
    %v627 = vld [vmem:[#allocation9 + $0x38] sm:$0xf]
    %v628 = vld [vmem:[#allocation9 + $0x3c] sm:$0xf]
    %v629 = vld [vmem:[%s6] sm:$0x1]
    %v631 = vlaneseq
    %v632 = vshrl.u32 %v631, 7
    %v633 = vsub.s32 0, %v632
    %v634 = vrot.slane %v629, %v633
    %v652 = vunpack.c.l.b16 %v613
    %v653 = vunpack.c.l.b16 %v614
    %v654 = vunpack.c.l.b16 %v615
    %v655 = vunpack.c.l.b16 %v616
    %v656 = vunpack.c.l.b16 %v617
    %v657 = vunpack.c.l.b16 %v618
    %v658 = vunpack.c.l.b16 %v619
    %v659 = vunpack.c.l.b16 %v620
    %v660 = vunpack.c.l.b16 %v621
    %v661 = vunpack.c.l.b16 %v622
    %v662 = vunpack.c.l.b16 %v623
    %v663 = vunpack.c.l.b16 %v624
    %v664 = vunpack.c.l.b16 %v625
    %v665 = vunpack.c.l.b16 %v626
    %v666 = vunpack.c.l.b16 %v627
    %v667 = vunpack.c.l.b16 %v628
    %v668 = vpack.c.b16 %v653, %v652
    %v669 = vpack.c.b16 %v655, %v654
    %v670 = vpack.c.b16 %v657, %v656
    %v671 = vpack.c.b16 %v659, %v658
    %v672 = vpack.c.b16 %v661, %v660
    %v673 = vpack.c.b16 %v663, %v662
    %v674 = vpack.c.b16 %v665, %v664
    %v675 = vpack.c.b16 %v667, %v666
    %684 = vmatprep.subr.bf16.mxu0 0
    %685 = vmatpush1.bf16.msra.mxu0 %v668
    %686 = vmatprep.subr.bf16.mxu0 0
    %687 = vmatpush1.bf16.msra.mxu0 %v669
    %688 = vmatprep.subr.bf16.mxu0 0
    %689 = vmatpush1.bf16.msra.mxu0 %v670
    %690 = vmatprep.subr.bf16.mxu0 0
    %691 = vmatpush1.bf16.msra.mxu0 %v671
    %692 = vmatprep.subr.bf16.mxu0 0
    %693 = vmatpush1.bf16.msra.mxu0 %v672
    %694 = vmatprep.subr.bf16.mxu0 0
    %695 = vmatpush1.bf16.msra.mxu0 %v673
    %696 = vmatprep.subr.bf16.mxu0 0
    %697 = vmatpush1.bf16.msra.mxu0 %v674
    %698 = vmatprep.subr.bf16.mxu0 0
    %699 = vmatpush1.bf16.msra.mxu0 %v675
    %700 = vmatprep.subr.bf16.mxu0 0
    %701 = vmatpush1.bf16.msra.mxu0 0
    %702 = vmatprep.subr.bf16.mxu0 0
    %703 = vmatpush1.bf16.msra.mxu0 0
    %704 = vmatprep.subr.bf16.mxu0 0
    %705 = vmatpush1.bf16.msra.mxu0 0
    %706 = vmatprep.subr.bf16.mxu0 0
    %707 = vmatpush1.bf16.msra.mxu0 0
    %708 = vmatprep.subr.bf16.mxu0 0
    %709 = vmatpush1.bf16.msra.mxu0 0
    %710 = vmatprep.subr.bf16.mxu0 0
    %711 = vmatpush1.bf16.msra.mxu0 0
    %712 = vmatprep.subr.bf16.mxu0 0
    %713 = vmatpush1.bf16.msra.mxu0 0
    %714 = vmatprep.subr.bf16.mxu0 0
    %715 = vmatpush1.bf16.msra.mxu0 0
    %716 = vmatprep.mubr.bf16.mxu0 0
    %717 = vmatmul.mubr.bf16.gmra.mrb[0].mxu0 %v612
    %v718 = vpop.f32.mrb[0].mxu0
    %v719 = vadd.f32 %v634, %v718
    %v720 = vpop.f32.mrb[0].mxu0
    %v721 = vpop.f32.mrb[0].mxu0
    %v722 = vadd.f32 %v634, %v721
    %v723 = vpop.f32.mrb[0].mxu0
    %724 = vdwg.mxu0
    %v725 = vmax.f32 %v719, 0.0
    %v726 = vmax.f32 %v722, 0.0
    %v727 = vpack.c.bf16 %v726, %v725
    %v728 = vld [vmem:[%s7] sm:$0x1]
    %s729 = sld [smem:[#allocation2]]
    %v730 = vstv %s729
    %731 = vmatprep.subr.bf16.mxu0 0
    %732 = vmatpush1.bf16.xpose.msra.mxu0 %v727
    %733 = vmatprep.subr.bf16.mxu0 0
    %734 = vmatpush1.bf16.xpose.msra.mxu0 0
    %735 = vmatprep.subr.bf16.mxu0 0
    %736 = vmatpush1.bf16.xpose.msra.mxu0 0
    %737 = vmatprep.subr.bf16.mxu0 0
    %738 = vmatpush1.bf16.xpose.msra.mxu0 0
    %739 = vmatprep.subr.bf16.mxu0 0
    %740 = vmatpush1.bf16.xpose.msra.mxu0 0
    %741 = vmatprep.subr.bf16.mxu0 0
    %742 = vmatpush1.bf16.xpose.msra.mxu0 0
    %743 = vmatprep.subr.bf16.mxu0 0
    %744 = vmatpush1.bf16.xpose.msra.mxu0 0
    %745 = vmatprep.subr.bf16.mxu0 0
    %746 = vmatpush1.bf16.xpose.msra.mxu0 0
    %747 = vmatprep.subr.bf16.mxu0 0
    %748 = vmatpush1.bf16.xpose.msra.mxu0 0
    %749 = vmatprep.subr.bf16.mxu0 0
    %750 = vmatpush1.bf16.xpose.msra.mxu0 0
    %751 = vmatprep.subr.bf16.mxu0 0
    %752 = vmatpush1.bf16.xpose.msra.mxu0 0
    %753 = vmatprep.subr.bf16.mxu0 0
    %754 = vmatpush1.bf16.xpose.msra.mxu0 0
    %755 = vmatprep.subr.bf16.mxu0 0
    %756 = vmatpush1.bf16.xpose.msra.mxu0 0
    %757 = vmatprep.subr.bf16.mxu0 0
    %758 = vmatpush1.bf16.xpose.msra.mxu0 0
    %759 = vmatprep.subr.bf16.mxu0 0
    %760 = vmatpush1.bf16.xpose.msra.mxu0 0
    %761 = vmatprep.subr.bf16.mxu0 0
    %762 = vmatpush1.bf16.xpose.msra.mxu0 0
    %763 = vmatprep.mubr.bf16.mxu0 0
    %764 = vmatmul.mubr.bf16.gmra.mrb[0].mxu0 %v728
    %v765 = vpop.f32.mrb[0].mxu0
    %v766 = vadd.f32 %v730, %v765
    %v767 = vpop.f32.mrb[0].mxu0
    %v768 = vpop.f32.mrb[0].mxu0
    %v769 = vpop.f32.mrb[0].mxu0
    %770 = vdwg.mxu0
    %vm771 = vcmask 122880
    %772 = vst.msk [vmem:[#allocation11] sm:$0x1] %vm771, %v766
    // Predicated region
    $region54: #{tpu_custom_call.1} parent=1 // pred_check
      _
    $region55: #{tpu_custom_call.1} parent=1 // pred_check_branch
      %774 = sbr.rel (0) target = $region57
    $region56: #{tpu_custom_call.1} parent=1 // pred_region
      %s776 = ssub.s32 16, 16
      %777 = vsyncadd [#allocation5], %s776
      %s779 = sshll.u32 [#allocation11], 4
      %s780 = int_to_ptr.vmem [resolvable:$true] %s779
      %782 = dma.vmem_to_hbm [thread:$0]  %s780, 16, %s9, [#allocation5]
    $region57: #{tpu_custom_call.1} parent=1 // pred_fallthru
      _
    // Predicated region
    $region58: #{tpu_custom_call.1} parent=1 // pred_check
      _
    $region59: #{tpu_custom_call.1} parent=1 // pred_check_branch
      %784 = sbr.rel (0) target = $region61
    $region60: #{tpu_custom_call.1} parent=1 // pred_region
      %785 = dma.done [#allocation5], 16
    $region61: #{tpu_custom_call.1} parent=1 // pred_fallthru
      _
    %786 = vsyncpa [#allocation4], 1
    %787 = vsyncpa [#allocation7], 1
    %788 = vsyncpa [#allocation10], 1
    %789 = vsyncpa [#allocation5], 1

</llo_original>
